<compile_context>
chip_gen: v5e
topology: v5e:2x2
jax: 0.10.0
libtpu: 0.0.40
codegen_flags: <defaults>
</compile_context>

<pallas_src>
import jax
import jax.numpy as jnp
from jax.experimental import pallas as pl
from jax.experimental.pallas import tpu as pltpu  # noqa: F401


def _dropout_of_uniform_kernel(bits_ref, o_ref):
    bits = bits_ref[...]  # uint32, one random word per element

    # Kept value = 2 * U[0,1): top 24 bits as an exact small integer, scaled by
    # 2^-23 (the dropout scale of 2 is folded into the constant).
    m24 = (bits >> jnp.uint32(8)).astype(jnp.int32)            # in [0, 2^24)
    two_u = m24.astype(jnp.float32) * jnp.float32(1.0 / (1 << 23))

    # Keep mask with p_drop = 0.5 from bit 0 (independent of the value, which
    # only uses bits 8..31).
    keep = (bits & jnp.uint32(1)) != jnp.uint32(0)

    o_ref[...] = jnp.where(keep, two_u, jnp.float32(0.0)).astype(o_ref.dtype)


def _forward(x1, key):
    # TODO(synk): on real hardware this could use the in-kernel TPU PRNG
    # (pltpu.prng_seed / prng_random_bits) to avoid staging the bits through HBM,
    # but that primitive has no CPU-interpret lowering, so bits come from XLA.
    shape = x1.shape
    ndim = x1.ndim
    bits = jax.random.bits(key, shape=shape, dtype=jnp.uint32)
    return pl.pallas_call(
        _dropout_of_uniform_kernel,
        out_shape=jax.ShapeDtypeStruct(shape, x1.dtype),
        in_specs=[pl.BlockSpec(shape, lambda: (0,) * ndim)],   # whole-array block
        out_specs=pl.BlockSpec(shape, lambda: (0,) * ndim),    # whole-array block
    )(bits)


model_forward = jax.jit(_forward)


if __name__ == "__main__":
    key = jax.random.PRNGKey(0)
    k_x, k_rng = jax.random.split(key)

    # Matches the reference: x1 = torch.randn(1, 2, 2); only shape/dtype matter.
    x1 = jax.random.normal(k_x, (1, 2, 2), dtype=jnp.float32)

    x5 = model_forward(x1, k_rng)
    jax.block_until_ready(x5)

    # Sanity: dropout-of-uniform semantics -> every element is 0 or in [0, 2).
    assert x5.shape == x1.shape and x5.dtype == x1.dtype
    assert bool(jnp.all((x5 == 0.0) | ((x5 >= 0.0) & (x5 < 2.0))))

    print("KERNEL_OK")
</pallas_src>

<mosaic_0001>
module attributes {stable_mosaic.version = 11 : i64} {
  func.func @_dropout_of_uniform_kernel(%arg0: memref<1x2x2xi32, #tpu.memory_space<vmem>>, %arg1: memref<1x2x2xf32, #tpu.memory_space<vmem>>) attributes {dimension_semantics = [], scalar_prefetch = 0 : i64, scratch_operands = 0 : i64, tpu.core_type = #tpu.core_type<tc>} {
    %c0 = arith.constant 0 : index
    %c0_0 = arith.constant 0 : index
    %c0_1 = arith.constant 0 : index
    %0 = vector.load %arg0[%c0, %c0_0, %c0_1] : memref<1x2x2xi32, #tpu.memory_space<vmem>>, vector<1x2x2xi32>
    %c8_i32 = arith.constant 8 : i32
    %1 = vector.broadcast %c8_i32 : i32 to vector<1x2x2xi32>
    %2 = arith.shrui %0, %1 : vector<1x2x2xi32>
    %3 = arith.sitofp %2 : vector<1x2x2xi32> to vector<1x2x2xf32>
    %cst = arith.constant 1.1920929E-7 : f32
    %4 = vector.broadcast %cst : f32 to vector<1x2x2xf32>
    %5 = arith.mulf %3, %4 : vector<1x2x2xf32>
    %c1_i32 = arith.constant 1 : i32
    %6 = vector.broadcast %c1_i32 : i32 to vector<1x2x2xi32>
    %7 = arith.andi %0, %6 : vector<1x2x2xi32>
    %c0_i32 = arith.constant 0 : i32
    %8 = vector.broadcast %c0_i32 : i32 to vector<1x2x2xi32>
    %9 = arith.cmpi ne, %7, %8 : vector<1x2x2xi32>
    %cst_2 = arith.constant 0.000000e+00 : f32
    %10 = vector.broadcast %cst_2 : f32 to vector<1x2x2xf32>
    %11 = arith.select %9, %5, %10 : vector<1x2x2xi1>, vector<1x2x2xf32>
    %c0_3 = arith.constant 0 : index
    %c0_4 = arith.constant 0 : index
    %c0_5 = arith.constant 0 : index
    %12 = vector.load %arg1[%c0_3, %c0_4, %c0_5] : memref<1x2x2xf32, #tpu.memory_space<vmem>>, vector<1x2x2xf32>
    tpu.vector_store %arg1[%c0_3, %c0_4, %c0_5], %11 {strides = array<i32>} : memref<1x2x2xf32, #tpu.memory_space<vmem>>, vector<1x2x2xf32>,
    return
  }
}

</mosaic_0001>

<llo_original>
// kernel: _forward.1
$region0: #{_forward.1}
  #allocation0 [shape = 'u32[]', space=smem, size = 0x4, offset = 0x4, fixed_abs, tag = 'smem constant byte address 0x4 - core index']
  #allocation1 [shape = 'u32[72,128]{1,0:T(1,128)}', space=vmem, size = 0x9000, scoped, tag = 'internal scratch']
  %s0 = inlined_call_operand.vmem [shape: u32[1,2,2], index: 0, kind: input, shape index: {}]
  %s1 = inlined_call_operand.hbm [shape: f32[1,2,2], index: 1, kind: output, shape index: {}]
  %s2 = sld [smem:[#allocation0]]
  $region14: #{_forward.1} parent=0
    _
  %s4 = ssub.s32 1, %s2
  %s5 = scalar_select 0, %s4, %s2
  $region1: #{_forward.1} parent=0
    #allocation2 [shape = 'u8[1024]{0}', space=vmem, size = 0x400, scoped, tag = 'output window, operand 0, single buffered']
    #allocation3 [shape = 's32[1]{0}', space=sflag, size = 0x4, scoped, tag = 'scoped memory for _forward.1']
    %6 = vsyncpa [#allocation3], 0
    // Predicated region
    $region2: #{_forward.1} parent=1 // pred_check
      _
    $region3: #{_forward.1} parent=1 // pred_check_branch
      %8 = sbr.rel (0) target = $region5
    $region4: #{_forward.1} parent=1 // pred_region
      _
    $region5: #{_forward.1} parent=1 // pred_fallthru
      _
    %v9 = vld [vmem:[%s0] sm:$0x3]
    %v10 = vshrl.u32 %v9, 8
    %v11 = vcvt.s32.f32 %v10
    %v12 = vmul.f32 %v11, 1.1920929e-07
    %v13 = vand.u32 %v9, 1
    %vm14 = vcmp.ne.s32.totalorder %v13, 0
    %v15 = vsel %vm14, %v12, 0.0
    %vm16 = vcmask 9216
    %17 = vst.msk [vmem:[#allocation2] sm:$0x3] %vm16, %v15
    // Predicated region
    $region6: #{_forward.1} parent=1 // pred_check
      _
    $region7: #{_forward.1} parent=1 // pred_check_branch
      %19 = sbr.rel (0) target = $region9
    $region8: #{_forward.1} parent=1 // pred_region
      %21 = vsyncadd [#allocation3], 0
      %s23 = sshll.u32 [#allocation2], 4
      %s24 = int_to_ptr.vmem [resolvable:$true] %s23
      %s25 = sshll.u32 %s1, 4
      %s26 = int_to_ptr.hbm [resolvable:$true] %s25
      %28 = dma.vmem_to_hbm [thread:$0]  %s24, 32, %s26, [#allocation3]
    $region9: #{_forward.1} parent=1 // pred_fallthru
      _
    // Predicated region
    $region10: #{_forward.1} parent=1 // pred_check
      _
    $region11: #{_forward.1} parent=1 // pred_check_branch
      %30 = sbr.rel (0) target = $region13
    $region12: #{_forward.1} parent=1 // pred_region
      %32 = dma.done [#allocation3], 32
    $region13: #{_forward.1} parent=1 // pred_fallthru
      _
    %33 = vsyncpa [#allocation3], 1

</llo_original>
